<compile_context>
chip_gen: v5e
topology: v5e:2x2
jax: 0.10.0
libtpu: 0.0.40
codegen_flags: <defaults>
</compile_context>

<pallas_src>
import jax
import jax.numpy as jnp
from jax.experimental import pallas as pl
from jax.experimental.pallas import tpu as pltpu


_LANE = 128
_TB_CANDIDATES = (4096, 2048, 1024, 512, 256, 128)


def critic_kernel(x_ref, w1_ref, b1_ref, w2_ref, b2_ref, w3_ref, b3_ref, out_ref):
    """One batch tile of the critic MLP, batch-on-lanes layout.

    x_ref : (TB, S) f32      w1_ref: (H, S) f32     b1_ref: (H, 1) f32
    w2_ref: (H, H) f32       b2_ref: (H, 1) f32
    w3_ref: (1, H) f32       b3_ref: (1, 1) f32 in SMEM
    out_ref: (1, TB) f32  (lane-dense row of values)
    """
    x = x_ref[...].astype(jnp.bfloat16)                               # (TB, S)

    # Layer 1: W1 @ x^T (contract over S) -> (H, TB); batch lives on lanes.
    h1 = jax.lax.dot_general(
        w1_ref[...].astype(jnp.bfloat16), x, (((1,), (1,)), ((), ())),
        preferred_element_type=jnp.float32)
    h1 = jnp.tanh(h1 + b1_ref[...])                                   # (H, TB) f32

    # Layer 2: W2 @ h1 -> (H, TB)
    h2 = jnp.dot(w2_ref[...].astype(jnp.bfloat16), h1.astype(jnp.bfloat16),
                 preferred_element_type=jnp.float32)
    h2 = jnp.tanh(h2 + b2_ref[...])                                   # (H, TB) f32

    # Layer 3: W3 @ h2 -> (1, TB); add the scalar bias from SMEM.
    z = jnp.dot(w3_ref[...].astype(jnp.bfloat16), h2.astype(jnp.bfloat16),
                preferred_element_type=jnp.float32)
    out_ref[...] = z + b3_ref[0, 0]


def _pick_batch_tile(batch):
    """Largest lane-aligned batch tile, capped so v7x gets >= 2 grid steps."""
    tb = _LANE
    for cand in _TB_CANDIDATES:
        if batch >= cand:
            tb = cand
            break
    # Guarantee at least two grid steps when there is enough work, so the
    # "parallel" batch axis can shard across v7x's two TensorCores.
    if batch >= 2 * _LANE and pl.cdiv(batch, tb) < 2:
        tb = max(_LANE, ((batch // 2) // _LANE) * _LANE)
    return tb


def critic_forward(state, params):
    """Pallas equivalent of Critic.forward: (B, S) float32 -> (B,) values."""
    B, S = state.shape
    H = params["w1"].shape[0]

    TB = _pick_batch_tile(B)
    num_steps = pl.cdiv(B, TB)
    B_pad = num_steps * TB
    if B_pad != B:
        # Padded ceil-div grid: pad the batch with zero rows, slice afterwards.
        state = jnp.pad(state, ((0, B_pad - B), (0, 0)))

    out = pl.pallas_call(
        critic_kernel,
        out_shape=jax.ShapeDtypeStruct((1, B_pad), jnp.float32),
        grid=(num_steps,),
        in_specs=[
            pl.BlockSpec((TB, S), lambda i: (i, 0)),            # state tile (pipelined)
            pl.BlockSpec((H, S), lambda i: (0, 0)),             # W1 (resident)
            pl.BlockSpec((H, 1), lambda i: (0, 0)),             # b1
            pl.BlockSpec((H, H), lambda i: (0, 0)),             # W2
            pl.BlockSpec((H, 1), lambda i: (0, 0)),             # b2
            pl.BlockSpec((1, H), lambda i: (0, 0)),             # W3
            pl.BlockSpec(memory_space=pltpu.MemorySpace.SMEM),  # b3 scalar
        ],
        out_specs=pl.BlockSpec((1, TB), lambda i: (0, i)),      # lane-dense values
        compiler_params=pltpu.CompilerParams(
            dimension_semantics=("parallel",),
        ),
    )(
        state,
        params["w1"], params["b1"],
        params["w2"], params["b2"],
        params["w3"], params["b3"],
    )
    # PyTorch: .squeeze(dim=1) on the (B, 1) head output -> (B,).  Drop padding.
    return out[0, :B]


def init_params(key, state_size, hidden_size):
    """nn.Linear default init U(-1/sqrt(fan_in), +), PyTorch (out, in) layout, f32."""
    ks = jax.random.split(key, 6)

    def unif(k, shape, fan_in):
        bound = 1.0 / float(fan_in) ** 0.5
        return jax.random.uniform(k, shape, jnp.float32, -bound, bound)

    return {
        "w1": unif(ks[0], (hidden_size, state_size), state_size),
        "b1": unif(ks[1], (hidden_size, 1), state_size),
        "w2": unif(ks[2], (hidden_size, hidden_size), hidden_size),
        "b2": unif(ks[3], (hidden_size, 1), hidden_size),
        "w3": unif(ks[4], (1, hidden_size), hidden_size),
        "b3": unif(ks[5], (1, 1), hidden_size),
    }


def reference_forward(state, params):
    """Pure-JAX reference mirroring the kernel's numerics (bf16 MXU, f32 accum)."""
    x = state.astype(jnp.bfloat16)
    h1 = jnp.tanh(
        jax.lax.dot_general(x, params["w1"].astype(jnp.bfloat16),
                            (((1,), (1,)), ((), ())),
                            preferred_element_type=jnp.float32)
        + params["b1"][:, 0])
    h2 = jnp.tanh(
        jax.lax.dot_general(h1.astype(jnp.bfloat16),
                            params["w2"].astype(jnp.bfloat16),
                            (((1,), (1,)), ((), ())),
                            preferred_element_type=jnp.float32)
        + params["b2"][:, 0])
    z = jax.lax.dot_general(h2.astype(jnp.bfloat16),
                            params["w3"].astype(jnp.bfloat16),
                            (((1,), (1,)), ((), ())),
                            preferred_element_type=jnp.float32)
    return (z + params["b3"][0, 0])[:, 0]


if __name__ == "__main__":
    key = jax.random.PRNGKey(0)
    S, H = 16, 32  # state_size, hidden_size

    k_state, k_params, k_small = jax.random.split(key, 3)
    params = init_params(k_params, S, H)
    fwd = jax.jit(critic_forward)

    # Case 1: multi-step, padded grid.  B=300 -> TB=256, padded to 512, grid=(2,)
    # (exercises the pipelined multi-step path + tail padding/slicing).
    B = 300
    state = jax.random.normal(k_state, (B, S), jnp.float32)
    value = fwd(state, params)
    jax.block_until_ready(value)
    value_ref = reference_forward(state, params)
    assert value.shape == (B,)
    assert jnp.allclose(value, value_ref, atol=2e-3, rtol=2e-3), (
        float(jnp.max(jnp.abs(value - value_ref))))

    # Case 2: tiny batch.  B=8 -> padded to a single 128-row tile, grid=(1,).
    B2 = 8
    state2 = jax.random.normal(k_small, (B2, S), jnp.float32)
    value2 = fwd(state2, params)
    jax.block_until_ready(value2)
    value2_ref = reference_forward(state2, params)
    assert value2.shape == (B2,)
    assert jnp.allclose(value2, value2_ref, atol=2e-3, rtol=2e-3), (
        float(jnp.max(jnp.abs(value2 - value2_ref))))

    print("KERNEL_OK")
</pallas_src>

<mosaic_0001>
module attributes {stable_mosaic.version = 11 : i64} {
  func.func @critic_kernel(%arg0: i32, %arg1: memref<256x16xf32, #tpu.memory_space<vmem>>, %arg2: memref<32x16xf32, #tpu.memory_space<vmem>>, %arg3: memref<32x1xf32, #tpu.memory_space<vmem>>, %arg4: memref<32x32xf32, #tpu.memory_space<vmem>>, %arg5: memref<32x1xf32, #tpu.memory_space<vmem>>, %arg6: memref<1x32xf32, #tpu.memory_space<vmem>>, %arg7: memref<1x1xf32, #tpu.memory_space<smem>>, %arg8: memref<1x256xf32, #tpu.memory_space<vmem>>) attributes {dimension_semantics = [#tpu.dimension_semantics<parallel>], iteration_bounds = array<i64: 2>, scalar_prefetch = 0 : i64, scratch_operands = 0 : i64, tpu.core_type = #tpu.core_type<tc>, window_params = [{transform_indices = @transform_0, window_bounds = array<i64: 256, 16>}, {pipeline_mode = #tpu.pipeline_mode<synchronous>, transform_indices = @transform_1, window_bounds = array<i64: 32, 16>}, {pipeline_mode = #tpu.pipeline_mode<synchronous>, transform_indices = @transform_2, window_bounds = array<i64: 32, 1>}, {pipeline_mode = #tpu.pipeline_mode<synchronous>, transform_indices = @transform_3, window_bounds = array<i64: 32, 32>}, {pipeline_mode = #tpu.pipeline_mode<synchronous>, transform_indices = @transform_4, window_bounds = array<i64: 32, 1>}, {pipeline_mode = #tpu.pipeline_mode<synchronous>, transform_indices = @transform_5, window_bounds = array<i64: 1, 32>}, {transform_indices = @transform_6, window_bounds = array<i64: 1, 1>}, {transform_indices = @transform_7, window_bounds = array<i64: 1, 256>}]} {
    %c0 = arith.constant 0 : index
    %c0_0 = arith.constant 0 : index
    %0 = vector.load %arg1[%c0, %c0_0] : memref<256x16xf32, #tpu.memory_space<vmem>>, vector<256x16xf32>
    %1 = arith.truncf %0 : vector<256x16xf32> to vector<256x16xbf16>
    %c0_1 = arith.constant 0 : index
    %c0_2 = arith.constant 0 : index
    %2 = vector.load %arg2[%c0_1, %c0_2] : memref<32x16xf32, #tpu.memory_space<vmem>>, vector<32x16xf32>
    %3 = arith.truncf %2 : vector<32x16xf32> to vector<32x16xbf16>
    %cst = arith.constant dense<0.000000e+00> : vector<32x256xf32>
    %4 = tpu.matmul %3, %1, %cst {dimension_numbers = #tpu.dot_dimension_numbers<[1], [1], [0], [0], [0, 0, 1, 0], [], []>} : vector<32x16xbf16>, vector<256x16xbf16>, vector<32x256xf32> -> vector<32x256xf32>
    %c0_3 = arith.constant 0 : index
    %c0_4 = arith.constant 0 : index
    %5 = vector.load %arg3[%c0_3, %c0_4] : memref<32x1xf32, #tpu.memory_space<vmem>>, vector<32x1xf32>
    %6 = vector.broadcast %5 : vector<32x1xf32> to vector<32x256xf32>
    %7 = arith.addf %4, %6 : vector<32x256xf32>
    %8 = math.tanh %7 : vector<32x256xf32>
    %c0_5 = arith.constant 0 : index
    %c0_6 = arith.constant 0 : index
    %9 = vector.load %arg4[%c0_5, %c0_6] : memref<32x32xf32, #tpu.memory_space<vmem>>, vector<32x32xf32>
    %10 = arith.truncf %9 : vector<32x32xf32> to vector<32x32xbf16>
    %11 = arith.truncf %8 : vector<32x256xf32> to vector<32x256xbf16>
    %cst_7 = arith.constant dense<0.000000e+00> : vector<32x256xf32>
    %12 = tpu.matmul %10, %11, %cst_7 {dimension_numbers = #tpu.dot_dimension_numbers<[1], [0], [0], [1], [0, 0, 1, 1], [], []>} : vector<32x32xbf16>, vector<32x256xbf16>, vector<32x256xf32> -> vector<32x256xf32>
    %c0_8 = arith.constant 0 : index
    %c0_9 = arith.constant 0 : index
    %13 = vector.load %arg5[%c0_8, %c0_9] : memref<32x1xf32, #tpu.memory_space<vmem>>, vector<32x1xf32>
    %14 = vector.broadcast %13 : vector<32x1xf32> to vector<32x256xf32>
    %15 = arith.addf %12, %14 : vector<32x256xf32>
    %16 = math.tanh %15 : vector<32x256xf32>
    %c0_10 = arith.constant 0 : index
    %c0_11 = arith.constant 0 : index
    %17 = vector.load %arg6[%c0_10, %c0_11] : memref<1x32xf32, #tpu.memory_space<vmem>>, vector<1x32xf32>
    %18 = arith.truncf %17 : vector<1x32xf32> to vector<1x32xbf16>
    %19 = arith.truncf %16 : vector<32x256xf32> to vector<32x256xbf16>
    %cst_12 = arith.constant dense<0.000000e+00> : vector<1x256xf32>
    %20 = tpu.matmul %18, %19, %cst_12 {dimension_numbers = #tpu.dot_dimension_numbers<[1], [0], [0], [1], [0, 0, 1, 1], [], []>} : vector<1x32xbf16>, vector<32x256xbf16>, vector<1x256xf32> -> vector<1x256xf32>
    %c0_13 = arith.constant 0 : index
    %c0_14 = arith.constant 0 : index
    %21 = memref.load %arg7[%c0_13, %c0_14] : memref<1x1xf32, #tpu.memory_space<smem>>
    %22 = vector.broadcast %21 : f32 to vector<1x256xf32>
    %23 = arith.addf %20, %22 : vector<1x256xf32>
    %c0_15 = arith.constant 0 : index
    %c0_16 = arith.constant 0 : index
    %24 = vector.load %arg8[%c0_15, %c0_16] : memref<1x256xf32, #tpu.memory_space<vmem>>, vector<1x256xf32>
    tpu.vector_store %arg8[%c0_15, %c0_16], %23 {strides = array<i32>} : memref<1x256xf32, #tpu.memory_space<vmem>>, vector<1x256xf32>,
    return
  }
  func.func @transform_0(%arg0: i32) -> (i32, i32) {
    %c0_i32 = arith.constant 0 : i32
    %c0_i32_0 = arith.constant 0 : i32
    return %arg0, %c0_i32 : i32, i32
  }
  func.func @transform_1(%arg0: i32) -> (i32, i32) {
    %c0_i32 = arith.constant 0 : i32
    %c0_i32_0 = arith.constant 0 : i32
    %c0_i32_1 = arith.constant 0 : i32
    return %c0_i32, %c0_i32_0 : i32, i32
  }
  func.func @transform_2(%arg0: i32) -> (i32, i32) {
    %c0_i32 = arith.constant 0 : i32
    %c0_i32_0 = arith.constant 0 : i32
    %c0_i32_1 = arith.constant 0 : i32
    return %c0_i32, %c0_i32_0 : i32, i32
  }
  func.func @transform_3(%arg0: i32) -> (i32, i32) {
    %c0_i32 = arith.constant 0 : i32
    %c0_i32_0 = arith.constant 0 : i32
    %c0_i32_1 = arith.constant 0 : i32
    return %c0_i32, %c0_i32_0 : i32, i32
  }
  func.func @transform_4(%arg0: i32) -> (i32, i32) {
    %c0_i32 = arith.constant 0 : i32
    %c0_i32_0 = arith.constant 0 : i32
    %c0_i32_1 = arith.constant 0 : i32
    return %c0_i32, %c0_i32_0 : i32, i32
  }
  func.func @transform_5(%arg0: i32) -> (i32, i32) {
    %c0_i32 = arith.constant 0 : i32
    %c0_i32_0 = arith.constant 0 : i32
    %c0_i32_1 = arith.constant 0 : i32
    return %c0_i32, %c0_i32_0 : i32, i32
  }
  func.func @transform_6(%arg0: i32) -> (i32, i32) {
    %c0_i32 = arith.constant 0 : i32
    %c0_i32_0 = arith.constant 0 : i32
    %c0_i32_1 = arith.constant 0 : i32
    return %c0_i32, %c0_i32_0 : i32, i32
  }
  func.func @transform_7(%arg0: i32) -> (i32, i32) {
    %c0_i32 = arith.constant 0 : i32
    %c0_i32_0 = arith.constant 0 : i32
    return %c0_i32, %arg0 : i32, i32
  }
}

</mosaic_0001>

<llo_original>
// kernel: critic_forward.1
$region0: #{critic_forward.1}
  #allocation0 [shape = 'u32[]', space=smem, size = 0x4, offset = 0x4, fixed_abs, tag = 'smem constant byte address 0x4 - core index']
  #allocation1 [shape = 'u32[72,128]{1,0:T(1,128)}', space=vmem, size = 0x9000, scoped, tag = 'internal scratch']
  #allocation2 [shape = 'f32[1,1]{1,0:T(1,128)S(6)}', space=smem, size = 0x200, scoped, tag = 'scoped memory for critic_forward.1']
  %s0 = inlined_call_operand.vmem [shape: f32[512,16], index: 0, kind: input, shape index: {}]
  %s1 = inlined_call_operand.vmem [shape: f32[32,16], index: 1, kind: input, shape index: {}]
  %s2 = inlined_call_operand.vmem [shape: f32[32,1], index: 2, kind: input, shape index: {}]
  %s3 = inlined_call_operand.vmem [shape: f32[32,32], index: 3, kind: input, shape index: {}]
  %s4 = inlined_call_operand.vmem [shape: f32[32,1], index: 4, kind: input, shape index: {}]
  %s5 = inlined_call_operand.vmem [shape: f32[1,32], index: 5, kind: input, shape index: {}]
  %s6 = inlined_call_operand.<no memory space> [shape: f32[1,1], index: 6, kind: input, shape index: {}]
  %s7 = inlined_call_operand.vmem [shape: f32[1,512], index: 7, kind: output, shape index: {}]
  %s8 = sld [smem:[#allocation0]]
  $region61: #{critic_forward.1} parent=0
    _
  %s10 = ssub.s32 1, %s8
  %s11 = scalar_select 0, %s10, %s8
  %12 = sst [smem:[#allocation2]] %s6
  loop: start=0, step=1, limit=4
  $region2: #{critic_forward.1} parent=0 // loop_pre_header
    _
  $region3: #{critic_forward.1} parent=0 // loop_header
    %s14 = sphi 0, %s18
    %p15 = scmp.ge.s32.totalorder %s14, 4
    %s24 = sphi 0, %s26
    %s27 = sphi 0, %s24
    %s28 = sphi 0, %s27
    %s44 = sphi 0, %s28
    %s48 = sphi 0, %s48
    %s50 = sphi 0, %s48
    %s51 = sphi 0, %s50
    %s65 = sphi 0, %s51
    %s69 = sphi 0, %s69
    %s71 = sphi 0, %s69
    %s72 = sphi 0, %s71
    %s86 = sphi 0, %s72
    %s90 = sphi 0, %s90
    %s92 = sphi 0, %s90
    %s93 = sphi 0, %s92
    %s107 = sphi 0, %s93
    %s111 = sphi 0, %s111
    %s113 = sphi 0, %s111
    %s114 = sphi 0, %s113
    %s128 = sphi 0, %s114
    %s132 = sphi 0, %s132
    %s134 = sphi 0, %s132
    %s135 = sphi 0, %s134
    %s149 = sphi 0, %s135
    %s153 = sphi 0, %s153
    %s155 = sphi 0, %s153
    %s156 = sphi 0, %s155
    %s170 = sphi 0, %s156
    %s176 = sphi 0, %s178
    %s179 = sphi 0, %s176
    %s180 = sphi 0, %s179
    %s196 = sphi 0, %s180
  $region4: #{critic_forward.1} parent=0 // loop_header_branch
    %17 = sbr.rel (%p15) target = $region8
  $region5: #{critic_forward.1} parent=0 // loop_body
    %s19 = ssub.s32 %s14, 1
    %s20 = ssub.s32 %s14, 2
    %s21 = sadd.s32 %s14, 1
    %s22 = ssub.s32 %s14, %s21
    %p23 = scmp.eq.s32.totalorder %s22, 0
    %s25 = sadd.s32 %s24, 1
    %s26 = scalar_select %p23, %s24, %s25
    %p29 = pneg %p23
    %p30 = scmp.eq.s32.totalorder %s14, 1
    %p31 = por %p29, %p30
    %p32 = scmp.ne.s32.totalorder %s24, %s27
    %p33 = scmp.eq.s32.totalorder %s14, 0
    %p34 = por %p32, %p33
    %p35 = scmp.ne.s32.totalorder %s24, %s27
    %p36 = scmp.eq.s32.totalorder %s19, 1
    %p37 = por %p35, %p36
    %p38 = scmp.ne.s32.totalorder %s27, %s28
    %p39 = scmp.eq.s32.totalorder %s19, 0
    %p40 = por %p38, %p39
    %p41 = scmp.ne.s32.totalorder %s27, %s28
    %p42 = scmp.eq.s32.totalorder %s20, 1
    %p43 = por %p41, %p42
    %p45 = scmp.ne.s32.totalorder %s28, %s44
    %p46 = scmp.eq.s32.totalorder %s20, 0
    %p47 = por %p45, %p46
    %s49 = sadd.s32 %s48, 1
    %p52 = scmp.eq.s32.totalorder %s14, 1
    %p53 = scmp.ne.s32.totalorder %s48, %s50
    %p54 = scmp.eq.s32.totalorder %s14, 0
    %p55 = por %p53, %p54
    %p56 = scmp.ne.s32.totalorder %s48, %s50
    %p57 = scmp.eq.s32.totalorder %s19, 1
    %p58 = por %p56, %p57
    %p59 = scmp.ne.s32.totalorder %s50, %s51
    %p60 = scmp.eq.s32.totalorder %s19, 0
    %p61 = por %p59, %p60
    %p62 = scmp.ne.s32.totalorder %s50, %s51
    %p63 = scmp.eq.s32.totalorder %s20, 1
    %p64 = por %p62, %p63
    %p66 = scmp.ne.s32.totalorder %s51, %s65
    %p67 = scmp.eq.s32.totalorder %s20, 0
    %p68 = por %p66, %p67
    %s70 = sadd.s32 %s69, 1
    %p73 = scmp.eq.s32.totalorder %s14, 1
    %p74 = scmp.ne.s32.totalorder %s69, %s71
    %p75 = scmp.eq.s32.totalorder %s14, 0
    %p76 = por %p74, %p75
    %p77 = scmp.ne.s32.totalorder %s69, %s71
    %p78 = scmp.eq.s32.totalorder %s19, 1
    %p79 = por %p77, %p78
    %p80 = scmp.ne.s32.totalorder %s71, %s72
    %p81 = scmp.eq.s32.totalorder %s19, 0
    %p82 = por %p80, %p81
    %p83 = scmp.ne.s32.totalorder %s71, %s72
    %p84 = scmp.eq.s32.totalorder %s20, 1
    %p85 = por %p83, %p84
    %p87 = scmp.ne.s32.totalorder %s72, %s86
    %p88 = scmp.eq.s32.totalorder %s20, 0
    %p89 = por %p87, %p88
    %s91 = sadd.s32 %s90, 1
    %p94 = scmp.eq.s32.totalorder %s14, 1
    %p95 = scmp.ne.s32.totalorder %s90, %s92
    %p96 = scmp.eq.s32.totalorder %s14, 0
    %p97 = por %p95, %p96
    %p98 = scmp.ne.s32.totalorder %s90, %s92
    %p99 = scmp.eq.s32.totalorder %s19, 1
    %p100 = por %p98, %p99
    %p101 = scmp.ne.s32.totalorder %s92, %s93
    %p102 = scmp.eq.s32.totalorder %s19, 0
    %p103 = por %p101, %p102
    %p104 = scmp.ne.s32.totalorder %s92, %s93
    %p105 = scmp.eq.s32.totalorder %s20, 1
    %p106 = por %p104, %p105
    %p108 = scmp.ne.s32.totalorder %s93, %s107
    %p109 = scmp.eq.s32.totalorder %s20, 0
    %p110 = por %p108, %p109
    %s112 = sadd.s32 %s111, 1
    %p115 = scmp.eq.s32.totalorder %s14, 1
    %p116 = scmp.ne.s32.totalorder %s111, %s113
    %p117 = scmp.eq.s32.totalorder %s14, 0
    %p118 = por %p116, %p117
    %p119 = scmp.ne.s32.totalorder %s111, %s113
    %p120 = scmp.eq.s32.totalorder %s19, 1
    %p121 = por %p119, %p120
    %p122 = scmp.ne.s32.totalorder %s113, %s114
    %p123 = scmp.eq.s32.totalorder %s19, 0
    %p124 = por %p122, %p123
    %p125 = scmp.ne.s32.totalorder %s113, %s114
    %p126 = scmp.eq.s32.totalorder %s20, 1
    %p127 = por %p125, %p126
    %p129 = scmp.ne.s32.totalorder %s114, %s128
    %p130 = scmp.eq.s32.totalorder %s20, 0
    %p131 = por %p129, %p130
    %s133 = sadd.s32 %s132, 1
    %p136 = scmp.eq.s32.totalorder %s14, 1
    %p137 = scmp.ne.s32.totalorder %s132, %s134
    %p138 = scmp.eq.s32.totalorder %s14, 0
    %p139 = por %p137, %p138
    %p140 = scmp.ne.s32.totalorder %s132, %s134
    %p141 = scmp.eq.s32.totalorder %s19, 1
    %p142 = por %p140, %p141
    %p143 = scmp.ne.s32.totalorder %s134, %s135
    %p144 = scmp.eq.s32.totalorder %s19, 0
    %p145 = por %p143, %p144
    %p146 = scmp.ne.s32.totalorder %s134, %s135
    %p147 = scmp.eq.s32.totalorder %s20, 1
    %p148 = por %p146, %p147
    %p150 = scmp.ne.s32.totalorder %s135, %s149
    %p151 = scmp.eq.s32.totalorder %s20, 0
    %p152 = por %p150, %p151
    %s154 = sadd.s32 %s153, 1
    %p157 = scmp.eq.s32.totalorder %s14, 1
    %p158 = scmp.ne.s32.totalorder %s153, %s155
    %p159 = scmp.eq.s32.totalorder %s14, 0
    %p160 = por %p158, %p159
    %p161 = scmp.ne.s32.totalorder %s153, %s155
    %p162 = scmp.eq.s32.totalorder %s19, 1
    %p163 = por %p161, %p162
    %p164 = scmp.ne.s32.totalorder %s155, %s156
    %p165 = scmp.eq.s32.totalorder %s19, 0
    %p166 = por %p164, %p165
    %p167 = scmp.ne.s32.totalorder %s155, %s156
    %p168 = scmp.eq.s32.totalorder %s20, 1
    %p169 = por %p167, %p168
    %p171 = scmp.ne.s32.totalorder %s156, %s170
    %p172 = scmp.eq.s32.totalorder %s20, 0
    %p173 = por %p171, %p172
    %s174 = ssub.s32 %s14, %s21
    %p175 = scmp.eq.s32.totalorder %s174, 0
    %s177 = sadd.s32 %s176, 1
    %s178 = scalar_select %p175, %s176, %s177
    %p181 = pneg %p175
    %p182 = scmp.eq.s32.totalorder %s14, 1
    %p183 = por %p181, %p182
    %p184 = scmp.ne.s32.totalorder %s176, %s179
    %p185 = scmp.eq.s32.totalorder %s14, 0
    %p186 = por %p184, %p185
    %p187 = scmp.ne.s32.totalorder %s176, %s179
    %p188 = scmp.eq.s32.totalorder %s19, 1
    %p189 = por %p187, %p188
    %p190 = scmp.ne.s32.totalorder %s179, %s180
    %p191 = scmp.eq.s32.totalorder %s19, 0
    %p192 = por %p190, %p191
    %p193 = scmp.ne.s32.totalorder %s179, %s180
    %p194 = scmp.eq.s32.totalorder %s20, 1
    %p195 = por %p193, %p194
    %p197 = scmp.ne.s32.totalorder %s180, %s196
    %p198 = scmp.eq.s32.totalorder %s20, 0
    %p199 = por %p197, %p198
    %p200 = scmp.le.s32.totalorder 1, %s14
    %p201 = scmp.lt.s32.totalorder %s14, 3
    %p202 = pnand %p200, %p201
    %p203 = pneg %p202
    // Predicated region
    $region9: #{critic_forward.1} parent=5 // pred_check
      _
    $region10: #{critic_forward.1} parent=5 // pred_check_branch
      %205 = sbr.rel (%p202) target = $region12
    $region11: #{critic_forward.1} parent=5 // pred_region
      %s206 = ssub.s32 %s14, 1
      // Predicated region
      $region13: #{critic_forward.1} parent=11 // pred_check
        %p207 = pneg %p61
      $region14: #{critic_forward.1} parent=11 // pred_check_branch
        %209 = sbr.rel (%p207) target = $region16
      $region15: #{critic_forward.1} parent=11 // pred_region
        _
      $region16: #{critic_forward.1} parent=11 // pred_fallthru
        _
      // Predicated region
      $region17: #{critic_forward.1} parent=11 // pred_check
        %p210 = pneg %p82
      $region18: #{critic_forward.1} parent=11 // pred_check_branch
        %212 = sbr.rel (%p210) target = $region20
      $region19: #{critic_forward.1} parent=11 // pred_region
        _
      $region20: #{critic_forward.1} parent=11 // pred_fallthru
        _
      // Predicated region
      $region21: #{critic_forward.1} parent=11 // pred_check
        %p213 = pneg %p103
      $region22: #{critic_forward.1} parent=11 // pred_check_branch
        %215 = sbr.rel (%p213) target = $region24
      $region23: #{critic_forward.1} parent=11 // pred_region
        _
      $region24: #{critic_forward.1} parent=11 // pred_fallthru
        _
      // Predicated region
      $region25: #{critic_forward.1} parent=11 // pred_check
        %p216 = pneg %p124
      $region26: #{critic_forward.1} parent=11 // pred_check_branch
        %218 = sbr.rel (%p216) target = $region28
      $region27: #{critic_forward.1} parent=11 // pred_region
        _
      $region28: #{critic_forward.1} parent=11 // pred_fallthru
        _
      // Predicated region
      $region29: #{critic_forward.1} parent=11 // pred_check
        %p219 = pneg %p145
      $region30: #{critic_forward.1} parent=11 // pred_check_branch
        %221 = sbr.rel (%p219) target = $region32
      $region31: #{critic_forward.1} parent=11 // pred_region
        _
      $region32: #{critic_forward.1} parent=11 // pred_fallthru
        _
      // Predicated region
      $region33: #{critic_forward.1} parent=11 // pred_check
        %p222 = pneg %p166
      $region34: #{critic_forward.1} parent=11 // pred_check_branch
        %224 = sbr.rel (%p222) target = $region36
      $region35: #{critic_forward.1} parent=11 // pred_region
        _
      $region36: #{critic_forward.1} parent=11 // pred_fallthru
        _
    $region12: #{critic_forward.1} parent=5 // pred_fallthru
      _
    %p225 = scmp.lt.s32.totalorder %s14, 2
    // Predicated region
    $region37: #{critic_forward.1} parent=5 // pred_check
      %p226 = pneg %p225
    $region38: #{critic_forward.1} parent=5 // pred_check_branch
      %228 = sbr.rel (%p226) target = $region40
    $region39: #{critic_forward.1} parent=5 // pred_region
      // Predicated region
      $region41: #{critic_forward.1} parent=39 // pred_check
        %p229 = pneg %p34
      $region42: #{critic_forward.1} parent=39 // pred_check_branch
        %231 = sbr.rel (%p229) target = $region44
      $region43: #{critic_forward.1} parent=39 // pred_region
        %s232 = smul.u32 32, %s14
        %p233 = scmp.lt.s32.totalorder %s232, 63
        %s234 = scalar_select %p233, %s232, 63
        %s235 = smul.addr %s234, 8
        %s236 = scalar_lea.vmem %s0, %s235
        %s237 = smul.u32 32, %s14
      $region44: #{critic_forward.1} parent=39 // pred_fallthru
        _
    $region40: #{critic_forward.1} parent=5 // pred_fallthru
      _
    %p238 = scmp.le.s32.totalorder 1, %s14
    %p239 = scmp.lt.s32.totalorder %s14, 3
    %p240 = pnand %p238, %p239
    %p241 = pneg %p240
    // Predicated region
    $region45: #{critic_forward.1} parent=5 // pred_check
      _
    $region46: #{critic_forward.1} parent=5 // pred_check_branch
      %243 = sbr.rel (%p240) target = $region48
    $region47: #{critic_forward.1} parent=5 // pred_region
      %s244 = ssub.s32 %s14, 1
      %s245 = smul.u32 32, %s19
      %p246 = scmp.lt.s32.totalorder %s245, 63
      %s247 = scalar_select %p246, %s245, 63
      %s248 = smul.addr %s247, 8
      %s249 = scalar_lea.vmem %s0, %s248
      %p250 = pneg %p40
      %p251 = pneg %p37
      %p252 = pneg %p61
      %p253 = pneg %p58
      %p254 = pneg %p82
      %p255 = pneg %p79
      %p256 = pneg %p103
      %p257 = pneg %p100
      %p258 = pneg %p124
      %p259 = pneg %p121
      %p260 = pneg %p145
      %p261 = pneg %p142
      %p262 = pneg %p166
      %p263 = pneg %p163
      %p264 = pneg %p192
      %p265 = pneg %p189
      %s266 = smul.u32 2, %s19
      %p267 = scmp.lt.s32.totalorder %s266, 3
      %s268 = scalar_select %p267, %s266, 3
      %s269 = scalar_lea.vmem %s7, %s268
      %s270 = smul.u32 32, %s19
      %p271 = scmp.lt.s32.totalorder %s270, 63
      %s272 = scalar_select %p271, %s270, 63
      %s273 = smul.addr %s272, 8
      %s274 = scalar_lea.vmem %s0, %s273
      %s275 = smul.u32 32, %s19
      %s276 = smul.u32 2, %s19
      %p277 = scmp.lt.s32.totalorder %s276, 3
      %s278 = scalar_select %p277, %s276, 3
      %s279 = scalar_lea.vmem %s7, %s278
      %s280 = smul.u32 2, %s19
      %v282 = vld [vmem:[%s274] sm:$0xff]
      %v283 = vld [vmem:[%s274 + $0x8] sm:$0xff]
      %v284 = vld [vmem:[%s274 + $0x10] sm:$0xff]
      %v285 = vld [vmem:[%s274 + $0x18] sm:$0xff]
      %v286 = vld [vmem:[%s274 + $0x20] sm:$0xff]
      %v287 = vld [vmem:[%s274 + $0x28] sm:$0xff]
      %v288 = vld [vmem:[%s274 + $0x30] sm:$0xff]
      %v289 = vld [vmem:[%s274 + $0x38] sm:$0xff]
      %v290 = vld [vmem:[%s274 + $0x40] sm:$0xff]
      %v291 = vld [vmem:[%s274 + $0x48] sm:$0xff]
      %v292 = vld [vmem:[%s274 + $0x50] sm:$0xff]
      %v293 = vld [vmem:[%s274 + $0x58] sm:$0xff]
      %v294 = vld [vmem:[%s274 + $0x60] sm:$0xff]
      %v295 = vld [vmem:[%s274 + $0x68] sm:$0xff]
      %v296 = vld [vmem:[%s274 + $0x70] sm:$0xff]
      %v297 = vld [vmem:[%s274 + $0x78] sm:$0xff]
      %v298 = vld [vmem:[%s274 + $0x80] sm:$0xff]
      %v299 = vld [vmem:[%s274 + $0x88] sm:$0xff]
      %v300 = vld [vmem:[%s274 + $0x90] sm:$0xff]
      %v301 = vld [vmem:[%s274 + $0x98] sm:$0xff]
      %v302 = vld [vmem:[%s274 + $0xa0] sm:$0xff]
      %v303 = vld [vmem:[%s274 + $0xa8] sm:$0xff]
      %v304 = vld [vmem:[%s274 + $0xb0] sm:$0xff]
      %v305 = vld [vmem:[%s274 + $0xb8] sm:$0xff]
      %v306 = vld [vmem:[%s274 + $0xc0] sm:$0xff]
      %v307 = vld [vmem:[%s274 + $0xc8] sm:$0xff]
      %v308 = vld [vmem:[%s274 + $0xd0] sm:$0xff]
      %v309 = vld [vmem:[%s274 + $0xd8] sm:$0xff]
      %v310 = vld [vmem:[%s274 + $0xe0] sm:$0xff]
      %v311 = vld [vmem:[%s274 + $0xe8] sm:$0xff]
      %v312 = vld [vmem:[%s274 + $0xf0] sm:$0xff]
      %v313 = vld [vmem:[%s274 + $0xf8] sm:$0xff]
      %v314 = vpack.c.bf16 %v283, %v282
      %v315 = vpack.c.bf16 %v285, %v284
      %v316 = vpack.c.bf16 %v287, %v286
      %v317 = vpack.c.bf16 %v289, %v288
      %v318 = vpack.c.bf16 %v291, %v290
      %v319 = vpack.c.bf16 %v293, %v292
      %v320 = vpack.c.bf16 %v295, %v294
      %v321 = vpack.c.bf16 %v297, %v296
      %v322 = vpack.c.bf16 %v299, %v298
      %v323 = vpack.c.bf16 %v301, %v300
      %v324 = vpack.c.bf16 %v303, %v302
      %v325 = vpack.c.bf16 %v305, %v304
      %v326 = vpack.c.bf16 %v307, %v306
      %v327 = vpack.c.bf16 %v309, %v308
      %v328 = vpack.c.bf16 %v311, %v310
      %v329 = vpack.c.bf16 %v313, %v312
      %v330 = vld [vmem:[%s1] sm:$0xff]
      %v331 = vld [vmem:[%s1 + $0x8] sm:$0xff]
      %v332 = vld [vmem:[%s1 + $0x10] sm:$0xff]
      %v333 = vld [vmem:[%s1 + $0x18] sm:$0xff]
      %v334 = vpack.c.bf16 %v331, %v330
      %v335 = vpack.c.bf16 %v333, %v332
      %v336 = vld [vmem:[%s2] sm:$0xff]
      %v337 = vld [vmem:[%s2 + $0x8] sm:$0xff]
      %v338 = vld [vmem:[%s2 + $0x10] sm:$0xff]
      %v339 = vld [vmem:[%s2 + $0x18] sm:$0xff]
      %341 = vset.pattern.permute.xlu0 0
      %342 = vperm.xlu0 %341, %v336
      %v343 = vpop.permute.xlu0 %342
      %346 = vset.pattern.permute.xlu0 0
      %347 = vperm.xlu0 %346, %v337
      %v348 = vpop.permute.xlu0 %347
      %351 = vset.pattern.permute.xlu0 0
      %352 = vperm.xlu0 %351, %v338
      %v353 = vpop.permute.xlu0 %352
      %356 = vset.pattern.permute.xlu0 0
      %357 = vperm.xlu0 %356, %v339
      %v358 = vpop.permute.xlu0 %357
      %vm360 = vcmask 130048
      %v362 = vsel %vm360, %v334, 0
      %v365 = vsel %vm360, %v335, 0
      %v368 = vsel %vm360, %v314, 0
      %v371 = vsel %vm360, %v315, 0
      %v374 = vsel %vm360, %v316, 0
      %v377 = vsel %vm360, %v317, 0
      %v380 = vsel %vm360, %v318, 0
      %v383 = vsel %vm360, %v319, 0
      %v386 = vsel %vm360, %v320, 0
      %v389 = vsel %vm360, %v321, 0
      %v392 = vsel %vm360, %v322, 0
      %v395 = vsel %vm360, %v323, 0
      %v398 = vsel %vm360, %v324, 0
      %v401 = vsel %vm360, %v325, 0
      %v404 = vsel %vm360, %v326, 0
      %v407 = vsel %vm360, %v327, 0
      %v410 = vsel %vm360, %v328, 0
      %v413 = vsel %vm360, %v329, 0
      %415 = vmatpush.bf16.xpose.msra.mxu0 %v389
      %416 = vmatpush.bf16.xpose.msra.mxu0 %v386
      %417 = vmatpush.bf16.xpose.msra.mxu0 %v383
      %418 = vmatpush.bf16.xpose.msra.mxu0 %v380
      %419 = vmatpush.bf16.xpose.msra.mxu0 %v377
      %420 = vmatpush.bf16.xpose.msra.mxu0 %v374
      %421 = vmatpush.bf16.xpose.msra.mxu0 %v371
      %422 = vmatpush.bf16.xpose.msra.mxu0 %v368
      %423 = vmatmul.bf16.gmra.mxu0 %v362
      %v424 = vpop.f32.mrf.mxu0
      %v425 = vadd.f32 %v343, %v424
      %v426 = vpop.f32.mrf.mxu0
      %v427 = vadd.f32 %v348, %v426
      %428 = vmatmul.bf16.gmra.mxu0 %v365
      %v429 = vpop.f32.mrf.mxu0
      %v430 = vadd.f32 %v353, %v429
      %v431 = vpop.f32.mrf.mxu0
      %v432 = vadd.f32 %v358, %v431
      %433 = vdwg.mxu0
      %434 = vmatpush.bf16.xpose.msra.mxu0 %v413
      %435 = vmatpush.bf16.xpose.msra.mxu0 %v410
      %436 = vmatpush.bf16.xpose.msra.mxu0 %v407
      %437 = vmatpush.bf16.xpose.msra.mxu0 %v404
      %438 = vmatpush.bf16.xpose.msra.mxu0 %v401
      %439 = vmatpush.bf16.xpose.msra.mxu0 %v398
      %440 = vmatpush.bf16.xpose.msra.mxu0 %v395
      %441 = vmatpush.bf16.xpose.msra.mxu0 %v392
      %442 = vmatmul.bf16.gmra.mxu0 %v362
      %v443 = vpop.f32.mrf.mxu0
      %v444 = vadd.f32 %v343, %v443
      %v445 = vpop.f32.mrf.mxu0
      %v446 = vadd.f32 %v348, %v445
      %447 = vmatmul.bf16.gmra.mxu0 %v365
      %v448 = vpop.f32.mrf.mxu0
      %v449 = vadd.f32 %v353, %v448
      %v450 = vpop.f32.mrf.mxu0
      %v451 = vadd.f32 %v358, %v450
      %452 = vdwg.mxu0
      %v453 = vtanh.pop %v425
      %v454 = vtanh.pop %v444
      %v455 = vtanh.pop %v427
      %v456 = vtanh.pop %v446
      %v457 = vtanh.pop %v430
      %v458 = vtanh.pop %v449
      %v459 = vtanh.pop %v432
      %v460 = vtanh.pop %v451
      %v461 = vld [vmem:[%s3] sm:$0xff]
      %v462 = vld [vmem:[%s3 + $0x8] sm:$0xff]
      %v463 = vld [vmem:[%s3 + $0x10] sm:$0xff]
      %v464 = vld [vmem:[%s3 + $0x18] sm:$0xff]
      %v465 = vpack.c.bf16 %v462, %v461
      %v466 = vpack.c.bf16 %v464, %v463
      %v467 = vpack.c.bf16 %v455, %v453
      %v468 = vpack.c.bf16 %v456, %v454
      %v469 = vpack.c.bf16 %v459, %v457
      %v470 = vpack.c.bf16 %v460, %v458
      %v471 = vld [vmem:[%s4] sm:$0xff]
      %v472 = vld [vmem:[%s4 + $0x8] sm:$0xff]
      %v473 = vld [vmem:[%s4 + $0x10] sm:$0xff]
      %v474 = vld [vmem:[%s4 + $0x18] sm:$0xff]
      %476 = vset.pattern.permute.xlu0 0
      %477 = vperm.xlu0 %476, %v471
      %v478 = vpop.permute.xlu0 %477
      %481 = vset.pattern.permute.xlu0 0
      %482 = vperm.xlu0 %481, %v472
      %v483 = vpop.permute.xlu0 %482
      %486 = vset.pattern.permute.xlu0 0
      %487 = vperm.xlu0 %486, %v473
      %v488 = vpop.permute.xlu0 %487
      %491 = vset.pattern.permute.xlu0 0
      %492 = vperm.xlu0 %491, %v474
      %v493 = vpop.permute.xlu0 %492
      %vm495 = vcmask 261120
      %v497 = vsel %vm495, %v465, 0
      %v500 = vsel %vm495, %v466, 0
      %502 = vmatpush.bf16.msra.mxu0 0
      %503 = vmatpush.bf16.msra.mxu0 0
      %504 = vmatpush.bf16.msra.mxu0 0
      %505 = vmatpush.bf16.msra.mxu0 0
      %506 = vmatpush.bf16.msra.mxu0 0
      %507 = vmatpush.bf16.msra.mxu0 0
      %508 = vmatpush.bf16.msra.mxu0 %v469
      %509 = vmatpush.bf16.msra.mxu0 %v467
      %510 = vmatmul.bf16.gmra.mxu0 %v497
      %v511 = vpop.f32.mrf.mxu0
      %v512 = vadd.f32 %v478, %v511
      %v513 = vpop.f32.mrf.mxu0
      %v514 = vadd.f32 %v483, %v513
      %515 = vmatmul.bf16.gmra.mxu0 %v500
      %v516 = vpop.f32.mrf.mxu0
      %v517 = vadd.f32 %v488, %v516
      %v518 = vpop.f32.mrf.mxu0
      %v519 = vadd.f32 %v493, %v518
      %520 = vdwg.mxu0
      %521 = vmatpush.bf16.msra.mxu0 0
      %522 = vmatpush.bf16.msra.mxu0 0
      %523 = vmatpush.bf16.msra.mxu0 0
      %524 = vmatpush.bf16.msra.mxu0 0
      %525 = vmatpush.bf16.msra.mxu0 0
      %526 = vmatpush.bf16.msra.mxu0 0
      %527 = vmatpush.bf16.msra.mxu0 %v470
      %528 = vmatpush.bf16.msra.mxu0 %v468
      %529 = vmatmul.bf16.gmra.mxu0 %v497
      %v530 = vpop.f32.mrf.mxu0
      %v531 = vadd.f32 %v478, %v530
      %v532 = vpop.f32.mrf.mxu0
      %v533 = vadd.f32 %v483, %v532
      %534 = vmatmul.bf16.gmra.mxu0 %v500
      %v535 = vpop.f32.mrf.mxu0
      %v536 = vadd.f32 %v488, %v535
      %v537 = vpop.f32.mrf.mxu0
      %v538 = vadd.f32 %v493, %v537
      %539 = vdwg.mxu0
      %v540 = vtanh.pop %v512
      %v541 = vtanh.pop %v531
      %v542 = vtanh.pop %v514
      %v543 = vtanh.pop %v533
      %v544 = vtanh.pop %v517
      %v545 = vtanh.pop %v536
      %v546 = vtanh.pop %v519
      %v547 = vtanh.pop %v538
      %v548 = vld [vmem:[%s5] sm:$0x1]
      %v549 = vpack.c.bf16 %v548, %v548
      %v550 = vpack.c.bf16 %v542, %v540
      %v551 = vpack.c.bf16 %v543, %v541
      %v552 = vpack.c.bf16 %v546, %v544
      %v553 = vpack.c.bf16 %v547, %v545
      %s554 = sld [smem:[#allocation2]]
      %v555 = vstv %s554
      %v557 = vsel %vm495, %v549, 0
      %559 = vmatpush.bf16.msra.mxu0 0
      %560 = vmatpush.bf16.msra.mxu0 0
      %561 = vmatpush.bf16.msra.mxu0 0
      %562 = vmatpush.bf16.msra.mxu0 0
      %563 = vmatpush.bf16.msra.mxu0 0
      %564 = vmatpush.bf16.msra.mxu0 0
      %565 = vmatpush.bf16.msra.mxu0 %v552
      %566 = vmatpush.bf16.msra.mxu0 %v550
      %567 = vmatmul.bf16.gmra.mxu0 %v557
      %v568 = vpop.f32.mrf.mxu0
      %v569 = vadd.f32 %v555, %v568
      %v570 = vpop.f32.mrf.mxu0
      %571 = vdwg.mxu0
      %572 = vmatpush.bf16.msra.mxu0 0
      %573 = vmatpush.bf16.msra.mxu0 0
      %574 = vmatpush.bf16.msra.mxu0 0
      %575 = vmatpush.bf16.msra.mxu0 0
      %576 = vmatpush.bf16.msra.mxu0 0
      %577 = vmatpush.bf16.msra.mxu0 0
      %578 = vmatpush.bf16.msra.mxu0 %v553
      %579 = vmatpush.bf16.msra.mxu0 %v551
      %580 = vmatmul.bf16.gmra.mxu0 %v557
      %v581 = vpop.f32.mrf.mxu0
      %v582 = vadd.f32 %v555, %v581
      %v583 = vpop.f32.mrf.mxu0
      %584 = vdwg.mxu0
      %v587 = vrot.slane %v582, 7
      %vm588 = vcmask 1040384
      %v589 = vsel %vm588, %v569, %v587
      %v591 = vlaneseq
      %vm592 = vcmp.ge.s32.totalorder %v591, 0
      %vm593 = vcmp.lt.s32.totalorder %v591, 256
      %vm594 = vmand %vm592, %vm593
      %595 = vst.msk [vmem:[%s279] sm:$0x3] %vm594, %v589
      %s596 = smul.u32 2, %s19
      %p597 = scmp.lt.s32.totalorder %s596, 3
      %s598 = scalar_select %p597, %s596, 3
      %s599 = scalar_lea.vmem %s7, %s598
      // Predicated region
      $region49: #{critic_forward.1} parent=47 // pred_check
        %p600 = pneg %p189
      $region50: #{critic_forward.1} parent=47 // pred_check_branch
        %602 = sbr.rel (%p600) target = $region52
      $region51: #{critic_forward.1} parent=47 // pred_region
        %s603 = smul.u32 2, %s19
      $region52: #{critic_forward.1} parent=47 // pred_fallthru
        _
    $region48: #{critic_forward.1} parent=5 // pred_fallthru
      _
    %p604 = scmp.le.s32.totalorder 2, %s14
    // Predicated region
    $region53: #{critic_forward.1} parent=5 // pred_check
      %p605 = pneg %p604
    $region54: #{critic_forward.1} parent=5 // pred_check_branch
      %607 = sbr.rel (%p605) target = $region56
    $region55: #{critic_forward.1} parent=5 // pred_region
      %s608 = ssub.s32 %s14, 2
      // Predicated region
      $region57: #{critic_forward.1} parent=55 // pred_check
        %p609 = pneg %p195
      $region58: #{critic_forward.1} parent=55 // pred_check_branch
        %611 = sbr.rel (%p609) target = $region60
      $region59: #{critic_forward.1} parent=55 // pred_region
        %s612 = smul.u32 2, %s20
        %p613 = scmp.lt.s32.totalorder %s612, 3
        %s614 = scalar_select %p613, %s612, 3
        %s615 = scalar_lea.vmem %s7, %s614
      $region60: #{critic_forward.1} parent=55 // pred_fallthru
        _
    $region56: #{critic_forward.1} parent=5 // pred_fallthru
      _
  $region6: #{critic_forward.1} parent=0 // loop_footer
    %s18 = sadd.s32 1, %s14
  $region7: #{critic_forward.1} parent=0 // loop_footer_branch
    %13 = sbr.rel target = $region3
  $region8: #{critic_forward.1} parent=0 // loop_exit
    _

</llo_original>
